<compile_context>
chip_gen: v5e
topology: v5e:2x2
jax: 0.10.0
libtpu: 0.0.40
codegen_flags: <defaults>
</compile_context>

<pallas_src>
import functools
import math

import jax
import jax.numpy as jnp
import numpy as np
from jax.experimental import pallas as pl
from jax.experimental.pallas import tpu as pltpu


def _attn_kernel(x_ref, w_qkv_ref, b_qkv_ref, w_o_ref, b_o_ref, *rest,
                 num_heads, head_dim, seq_len, has_dropout, compute_dtype):
    if has_dropout:
        mask_ref, out_ref, qkv_ref, o_stage_ref = rest
    else:
        mask_ref = None
        out_ref, qkv_ref, o_stage_ref = rest

    D = head_dim
    F = num_heads * D
    sq = out_ref.shape[0]          # query-tile rows
    s_pad = x_ref.shape[0]         # padded sequence length
    i = pl.program_id(1)           # q-tile index ("arbitrary" axis)

    # Fused QKV projection for the whole (padded) sequence, computed ONCE per batch.
    # The q-tile axis is "arbitrary", so this scratch stays valid for all q tiles.
    @pl.when(i == 0)
    def _():
        qkv = jnp.dot(x_ref[...], w_qkv_ref[...],
                      preferred_element_type=jnp.float32)            # (s_pad, 3F) f32
        qkv_ref[...] = (qkv + b_qkv_ref[...]).astype(qkv_ref.dtype)  # cast to cdt once

    q_start = i * sq               # multiple of sq (itself a multiple of 8) -> aligned
    exact = jnp.dtype(compute_dtype) == jnp.dtype(jnp.float32)

    # Static unroll over heads; all per-head q/k/v slices are ref-side (masked) loads.
    for h in range(num_heads):
        lo, hi = h * D, (h + 1) * D
        qh = qkv_ref[pl.ds(q_start, sq), lo:hi]          # (sq, D)   scale pre-folded
        kh = qkv_ref[:, F + lo:F + hi]                   # (s_pad, D)
        vh = qkv_ref[:, 2 * F + lo:2 * F + hi]           # (s_pad, D)

        # scores = (q / sqrt(D)) @ k^T  — contract last dims, no explicit transpose.
        s = jax.lax.dot_general(qh, kh, (((1,), (1,)), ((), ())),
                                preferred_element_type=jnp.float32)  # (sq, s_pad)

        if has_dropout:
            # Reference applies F.dropout to the scaled scores BEFORE softmax:
            # multiplier is 0 (dropped) or 1/(1-p) (kept), precomputed on host.
            s = s * mask_ref[h]

        if seq_len < s_pad:
            # Mask padded key columns AFTER dropout so they can never be "undropped".
            col = jax.lax.broadcasted_iota(jnp.int32, s.shape, 1)
            s = jnp.where(col < seq_len, s, jnp.float32(-1e30))

        m = jnp.max(s, axis=-1, keepdims=True)
        e = jnp.exp(s - m)                                # f32 exp (v5e-safe)
        denom = jnp.sum(e, axis=-1, keepdims=True)        # (sq, 1)
        oh = jnp.dot(e.astype(compute_dtype), vh,
                     preferred_element_type=jnp.float32)  # (sq, D)
        # Deferred normalization on the small result; reciprocal goes to the EUP slot.
        oh = oh * pl.reciprocal(denom, approx=not exact)
        o_stage_ref[:, lo:hi] = oh.astype(o_stage_ref.dtype)   # stage head output

    # Single K=F output projection (fills the MXU; replaces H narrow-K matmuls).
    out = jnp.dot(o_stage_ref[...], w_o_ref[...], preferred_element_type=jnp.float32)
    out_ref[...] = (out + b_o_ref[...]).astype(out_ref.dtype)


def _pick_q_tiling(S, target):
    """Return (tile_rows, num_tiles, padded_seq_len); tile_rows is a multiple of 8."""
    target = max(8, (int(target) // 8) * 8)
    nq = max(1, -(-S // target))          # cdiv(S, target)
    sq = -(-S // nq)                      # cdiv(S, nq)
    sq = ((sq + 7) // 8) * 8
    return sq, nq, sq * nq


def _const_spec(shape):
    """Grid-invariant block: single-buffered if pl.Buffered is available."""
    idx = lambda b, i: (0,) * len(shape)
    if hasattr(pl, "Buffered"):
        try:
            return pl.BlockSpec(shape, idx, pipeline_mode=pl.Buffered(1))
        except TypeError:
            pass
    return pl.BlockSpec(shape, idx)


def siglip_self_attention(x, params, *, num_heads, dropout_rate=0.0, training=False,
                          dropout_mask=None, dropout_rng=None,
                          compute_dtype=jnp.bfloat16, q_block_target=256):
    """x: (B, S, F).  params: (wq, bq, wk, bk, wv, bv, wo, bo), weights (F_in, F_out).

    dropout_mask: optional (B, H, S, S) multiplier array (0 or 1/(1-p)); generated from
    dropout_rng if omitted and training with dropout_rate > 0.
    """
    B, S, F = x.shape
    assert F % num_heads == 0
    D = F // num_heads
    scale = 1.0 / math.sqrt(D)
    cdt = compute_dtype

    wq, bq, wk, bk, wv, bv, wo, bo = params

    sq, nq, S_pad = _pick_q_tiling(S, q_block_target)

    # Fused QKV weights/biases; 1/sqrt(D) folded into the Q columns (no in-kernel scale).
    w_qkv = jnp.concatenate([wq * scale, wk, wv], axis=1).astype(cdt)          # (F, 3F)
    b_qkv = jnp.concatenate([bq * scale, bk, bv]).reshape(1, 3 * F).astype(jnp.float32)
    w_o_c = wo.astype(cdt)
    b_o_row = bo.reshape(1, F).astype(jnp.float32)

    x_c = x.astype(cdt)
    if S_pad != S:
        x_c = jnp.pad(x_c, ((0, 0), (0, S_pad - S), (0, 0)))

    has_dropout = bool(training) and float(dropout_rate) > 0.0

    inputs = [x_c, w_qkv, b_qkv, w_o_c, b_o_row]
    in_specs = [
        pl.BlockSpec((None, S_pad, F), lambda b, i: (b, 0, 0)),   # x (full seq per batch)
        _const_spec((F, 3 * F)),                                  # fused QKV weight
        _const_spec((1, 3 * F)),                                  # fused QKV bias
        _const_spec((F, F)),                                      # output-proj weight
        _const_spec((1, F)),                                      # output-proj bias
    ]

    if has_dropout:
        if dropout_mask is None:
            key = dropout_rng if dropout_rng is not None else jax.random.PRNGKey(0)
            u = jax.random.uniform(key, (B, num_heads, S, S), dtype=jnp.float32)
            dropout_mask = jnp.where(u >= dropout_rate,
                                     1.0 / (1.0 - dropout_rate), 0.0)
        mask = dropout_mask.astype(jnp.float32)
        if S_pad != S:
            mask = jnp.pad(mask, ((0, 0), (0, 0), (0, S_pad - S), (0, S_pad - S)))
        inputs.append(mask)
        in_specs.append(
            pl.BlockSpec((None, num_heads, sq, S_pad), lambda b, i: (b, 0, i, 0)))

    kernel = functools.partial(
        _attn_kernel, num_heads=num_heads, head_dim=D, seq_len=S,
        has_dropout=has_dropout, compute_dtype=cdt)

    grid_spec = pltpu.PrefetchScalarGridSpec(
        num_scalar_prefetch=0,
        grid=(B, nq),
        in_specs=in_specs,
        out_specs=pl.BlockSpec((None, sq, F), lambda b, i: (b, i, 0)),
        scratch_shapes=[pltpu.VMEM((S_pad, 3 * F), cdt),   # fused QKV (per batch)
                        pltpu.VMEM((sq, F), cdt)],         # staged head outputs
    )

    # VMEM budget: actual buffer sum + in-kernel intermediates + headroom, capped at
    # 3/4 of the physical VMEM per core (≈48 MiB on v7x, ≈96 MiB on v5e/v6e).
    cb = jnp.dtype(cdt).itemsize
    ob = jnp.dtype(x.dtype).itemsize
    block_bytes = (2 * S_pad * F * cb          # x block (double-buffered)
                   + 4 * F * F * cb            # w_qkv + w_o (single-buffered)
                   + 4 * F * 4                 # biases (f32)
                   + 2 * sq * F * ob)          # out block (double-buffered)
    if has_dropout:
        block_bytes += 2 * num_heads * sq * S_pad * 4
    scratch_bytes = (S_pad * 3 * F + sq * F) * cb
    interm_bytes = (4 * sq * S_pad + S_pad * 3 * F + 4 * sq * F) * 4
    needed = block_bytes + scratch_bytes + interm_bytes + (8 << 20)
    try:
        cap = int(getattr(pltpu.get_tpu_info(), "vmem_capacity_bytes", 128 << 20))
    except Exception:
        cap = 128 << 20
    vmem_limit = int(min(max(needed, 16 << 20), (cap * 3) // 4))

    out = pl.pallas_call(
        kernel,
        out_shape=jax.ShapeDtypeStruct((B, S_pad, F), x.dtype),
        grid_spec=grid_spec,
        compiler_params=pltpu.CompilerParams(
            # Batch is "parallel" (feeds both v7x TCs when B >= 2); the q-tile axis
            # must be "arbitrary" because it reuses the per-batch QKV scratch in order.
            dimension_semantics=("parallel", "arbitrary"),
            vmem_limit_bytes=vmem_limit),
    )(*inputs)

    if S_pad != S:
        out = out[:, :S, :]
    return out


def _reference(x, params, *, num_heads, dropout_mask=None):
    """Pure-JAX mirror of the PyTorch forward (dropout mask optional, pre-softmax)."""
    B, S, F = x.shape
    D = F // num_heads
    wq, bq, wk, bk, wv, bv, wo, bo = params

    def heads(t):
        return t.reshape(B, S, num_heads, D).transpose(0, 2, 1, 3)     # (B, H, S, D)

    q = heads(x @ wq + bq)
    k = heads(x @ wk + bk)
    v = heads(x @ wv + bv)
    scores = jnp.einsum("bhqd,bhkd->bhqk", q, k) / jnp.sqrt(jnp.float32(D))
    if dropout_mask is not None:
        scores = scores * dropout_mask
    probs = jax.nn.softmax(scores, axis=-1)
    o = jnp.einsum("bhqk,bhkd->bhqd", probs, v)
    o = o.transpose(0, 2, 1, 3).reshape(B, S, F)
    return o @ wo + bo


if __name__ == "__main__":
    # Small shapes consistent with Configs: batch=2, seq=8, embeddingChannels=32, heads=4.
    B, S, F, H = 2, 8, 32, 4

    key = jax.random.PRNGKey(0)
    keys = jax.random.split(key, 10)
    x = jax.random.normal(keys[0], (B, S, F), dtype=jnp.float32)

    def init_w(k):
        return jax.random.normal(k, (F, F), dtype=jnp.float32) * 0.05

    def init_b(k):
        return jax.random.normal(k, (F,), dtype=jnp.float32) * 0.05

    params = (init_w(keys[1]), init_b(keys[2]),   # wq, bq
              init_w(keys[3]), init_b(keys[4]),   # wk, bk
              init_w(keys[5]), init_b(keys[6]),   # wv, bv
              init_w(keys[7]), init_b(keys[8]))   # wo, bo

    ref = jax.block_until_ready(_reference(x, params, num_heads=H))

    # Eval mode (dropout identity), f32 compute: tight check.
    out_f32 = jax.block_until_ready(
        siglip_self_attention(x, params, num_heads=H, dropout_rate=0.5,
                              training=False, compute_dtype=jnp.float32))
    np.testing.assert_allclose(np.asarray(out_f32), np.asarray(ref), rtol=2e-3, atol=2e-3)

    # Eval mode, bf16 compute (default / fast path): looser tolerance.
    out_bf16 = jax.block_until_ready(
        siglip_self_attention(x, params, num_heads=H, dropout_rate=0.5,
                              training=False, compute_dtype=jnp.bfloat16))
    np.testing.assert_allclose(np.asarray(out_bf16), np.asarray(ref), rtol=2e-2, atol=2e-2)

    # Training mode: same explicit pre-softmax dropout multiplier fed to the kernel
    # and to the masked JAX reference -> numerical check of the training path.
    p = 0.5
    u = jax.random.uniform(keys[9], (B, H, S, S), dtype=jnp.float32)
    drop_mult = jnp.where(u >= p, 1.0 / (1.0 - p), 0.0)
    ref_train = jax.block_until_ready(
        _reference(x, params, num_heads=H, dropout_mask=drop_mult))
    out_train = jax.block_until_ready(
        siglip_self_attention(x, params, num_heads=H, dropout_rate=p, training=True,
                              dropout_mask=drop_mult, compute_dtype=jnp.float32))
    np.testing.assert_allclose(np.asarray(out_train), np.asarray(ref_train),
                               rtol=2e-3, atol=2e-3)
    assert out_train.shape == (B, S, F)
    assert bool(jnp.all(jnp.isfinite(out_train)))

    print("KERNEL_OK")
</pallas_src>

<mosaic_0001>
module attributes {stable_mosaic.version = 11 : i64} {
  func.func @_attn_kernel(%arg0: i32, %arg1: i32, %arg2: memref<1x8x32xf32, #tpu.memory_space<vmem>>, %arg3: memref<32x96xf32, #tpu.memory_space<vmem>>, %arg4: memref<1x96xf32, #tpu.memory_space<vmem>>, %arg5: memref<32x32xf32, #tpu.memory_space<vmem>>, %arg6: memref<1x32xf32, #tpu.memory_space<vmem>>, %arg7: memref<1x8x32xf32, #tpu.memory_space<vmem>>, %arg8: memref<8x96xf32, #tpu.memory_space<vmem>>, %arg9: memref<8x32xf32, #tpu.memory_space<vmem>>) attributes {dimension_semantics = [#tpu.dimension_semantics<parallel>, #tpu.dimension_semantics<arbitrary>], iteration_bounds = array<i64: 2, 1>, scalar_prefetch = 0 : i64, scratch_operands = 2 : i64, tpu.core_type = #tpu.core_type<tc>, window_params = [{transform_indices = @transform_0, window_bounds = array<i64: 1, 8, 32>}, {pipeline_mode = #tpu.pipeline_mode<synchronous>, transform_indices = @transform_1, window_bounds = array<i64: 32, 96>}, {pipeline_mode = #tpu.pipeline_mode<synchronous>, transform_indices = @transform_2, window_bounds = array<i64: 1, 96>}, {pipeline_mode = #tpu.pipeline_mode<synchronous>, transform_indices = @transform_3, window_bounds = array<i64: 32, 32>}, {pipeline_mode = #tpu.pipeline_mode<synchronous>, transform_indices = @transform_4, window_bounds = array<i64: 1, 32>}, {transform_indices = @transform_5, window_bounds = array<i64: 1, 8, 32>}]} {
    %c0_i32 = arith.constant 0 : i32
    %0 = arith.cmpi eq, %arg1, %c0_i32 : i32
    %1 = arith.extui %0 : i1 to i32
    %c0_i32_0 = arith.constant 0 : i32
    %2 = arith.cmpi ne, %1, %c0_i32_0 : i32
    scf.if %2 {
      %c0_42 = arith.constant 0 : index
      %c0_43 = arith.constant 0 : index
      %c0_44 = arith.constant 0 : index
      %81 = vector.load %arg2[%c0_42, %c0_43, %c0_44] : memref<1x8x32xf32, #tpu.memory_space<vmem>>, vector<1x8x32xf32>
      %82 = vector.shape_cast %81 : vector<1x8x32xf32> to vector<8x32xf32>
      %c0_45 = arith.constant 0 : index
      %c0_46 = arith.constant 0 : index
      %83 = vector.load %arg3[%c0_45, %c0_46] : memref<32x96xf32, #tpu.memory_space<vmem>>, vector<32x96xf32>
      %cst_47 = arith.constant dense<0.000000e+00> : vector<8x96xf32>
      %84 = tpu.matmul %82, %83, %cst_47 {dimension_numbers = #tpu.dot_dimension_numbers<[1], [0], [0], [1], [0, 0, 1, 1], [], []>} : vector<8x32xf32>, vector<32x96xf32>, vector<8x96xf32> -> vector<8x96xf32>
      %c0_48 = arith.constant 0 : index
      %c0_49 = arith.constant 0 : index
      %85 = vector.load %arg4[%c0_48, %c0_49] : memref<1x96xf32, #tpu.memory_space<vmem>>, vector<1x96xf32>
      %86 = vector.broadcast %85 : vector<1x96xf32> to vector<8x96xf32>
      %87 = arith.addf %84, %86 : vector<8x96xf32>
      %c0_50 = arith.constant 0 : index
      %c0_51 = arith.constant 0 : index
      %88 = vector.load %arg8[%c0_50, %c0_51] : memref<8x96xf32, #tpu.memory_space<vmem>>, vector<8x96xf32>
      tpu.vector_store %arg8[%c0_50, %c0_51], %87 {strides = array<i32>} : memref<8x96xf32, #tpu.memory_space<vmem>>, vector<8x96xf32>,
    } else {
    }
    %c8_i32 = arith.constant 8 : i32
    %3 = arith.muli %arg1, %c8_i32 : i32
    %4 = arith.index_cast %3 : i32 to index
    %c0 = arith.constant 0 : index
    %5 = vector.load %arg8[%4, %c0] : memref<8x96xf32, #tpu.memory_space<vmem>>, vector<8x8xf32>
    %c0_1 = arith.constant 0 : index
    %c32 = arith.constant 32 : index
    %6 = vector.load %arg8[%c0_1, %c32] : memref<8x96xf32, #tpu.memory_space<vmem>>, vector<8x8xf32>
    %c0_2 = arith.constant 0 : index
    %c64 = arith.constant 64 : index
    %7 = vector.load %arg8[%c0_2, %c64] : memref<8x96xf32, #tpu.memory_space<vmem>>, vector<8x8xf32>
    %cst = arith.constant dense<0.000000e+00> : vector<8x8xf32>
    %8 = tpu.matmul %5, %6, %cst {dimension_numbers = #tpu.dot_dimension_numbers<[1], [1], [0], [0], [0, 0, 1, 0], [], []>} : vector<8x8xf32>, vector<8x8xf32>, vector<8x8xf32> -> vector<8x8xf32>
    %cst_3 = arith.constant dense<0xFF800000> : vector<8xf32>
    %9 = vector.multi_reduction <maximumf>, %8, %cst_3 [1] : vector<8x8xf32> to vector<8xf32>
    %10 = vector.shape_cast %9 : vector<8xf32> to vector<8x1xf32>
    %11 = vector.broadcast %10 : vector<8x1xf32> to vector<8x8xf32>
    %12 = arith.subf %8, %11 : vector<8x8xf32>
    %13 = math.exp %12 : vector<8x8xf32>
    %cst_4 = arith.constant dense<0.000000e+00> : vector<8xf32>
    %14 = vector.multi_reduction <add>, %13, %cst_4 [1] : vector<8x8xf32> to vector<8xf32>
    %15 = vector.shape_cast %14 : vector<8xf32> to vector<8x1xf32>
    %cst_5 = arith.constant dense<0.000000e+00> : vector<8x8xf32>
    %16 = tpu.matmul %13, %7, %cst_5 {dimension_numbers = #tpu.dot_dimension_numbers<[1], [0], [0], [1], [0, 0, 1, 1], [], []>} : vector<8x8xf32>, vector<8x8xf32>, vector<8x8xf32> -> vector<8x8xf32>
    %17 = tpu.reciprocal %15 : vector<8x1xf32> -> vector<8x1xf32>
    %18 = vector.broadcast %17 : vector<8x1xf32> to vector<8x8xf32>
    %19 = arith.mulf %16, %18 : vector<8x8xf32>
    %c0_6 = arith.constant 0 : index
    %c0_7 = arith.constant 0 : index
    %20 = vector.load %arg9[%c0_6, %c0_7] : memref<8x32xf32, #tpu.memory_space<vmem>>, vector<8x8xf32>
    tpu.vector_store %arg9[%c0_6, %c0_7], %19 {strides = array<i32>} : memref<8x32xf32, #tpu.memory_space<vmem>>, vector<8x8xf32>,
    %21 = arith.index_cast %3 : i32 to index
    %c8 = arith.constant 8 : index
    %22 = vector.load %arg8[%21, %c8] : memref<8x96xf32, #tpu.memory_space<vmem>>, vector<8x8xf32>
    %c0_8 = arith.constant 0 : index
    %c40 = arith.constant 40 : index
    %23 = vector.load %arg8[%c0_8, %c40] : memref<8x96xf32, #tpu.memory_space<vmem>>, vector<8x8xf32>
    %c0_9 = arith.constant 0 : index
    %c72 = arith.constant 72 : index
    %24 = vector.load %arg8[%c0_9, %c72] : memref<8x96xf32, #tpu.memory_space<vmem>>, vector<8x8xf32>
    %cst_10 = arith.constant dense<0.000000e+00> : vector<8x8xf32>
    %25 = tpu.matmul %22, %23, %cst_10 {dimension_numbers = #tpu.dot_dimension_numbers<[1], [1], [0], [0], [0, 0, 1, 0], [], []>} : vector<8x8xf32>, vector<8x8xf32>, vector<8x8xf32> -> vector<8x8xf32>
    %cst_11 = arith.constant dense<0xFF800000> : vector<8xf32>
    %26 = vector.multi_reduction <maximumf>, %25, %cst_11 [1] : vector<8x8xf32> to vector<8xf32>
    %27 = vector.shape_cast %26 : vector<8xf32> to vector<8x1xf32>
    %28 = vector.broadcast %27 : vector<8x1xf32> to vector<8x8xf32>
    %29 = arith.subf %25, %28 : vector<8x8xf32>
    %30 = math.exp %29 : vector<8x8xf32>
    %cst_12 = arith.constant dense<0.000000e+00> : vector<8xf32>
    %31 = vector.multi_reduction <add>, %30, %cst_12 [1] : vector<8x8xf32> to vector<8xf32>
    %32 = vector.shape_cast %31 : vector<8xf32> to vector<8x1xf32>
    %cst_13 = arith.constant dense<0.000000e+00> : vector<8x8xf32>
    %33 = tpu.matmul %30, %24, %cst_13 {dimension_numbers = #tpu.dot_dimension_numbers<[1], [0], [0], [1], [0, 0, 1, 1], [], []>} : vector<8x8xf32>, vector<8x8xf32>, vector<8x8xf32> -> vector<8x8xf32>
    %34 = tpu.reciprocal %32 : vector<8x1xf32> -> vector<8x1xf32>
    %35 = vector.broadcast %34 : vector<8x1xf32> to vector<8x8xf32>
    %36 = arith.mulf %33, %35 : vector<8x8xf32>
    %c0_14 = arith.constant 0 : index
    %c8_15 = arith.constant 8 : index
    %37 = vector.load %arg9[%c0_14, %c8_15] : memref<8x32xf32, #tpu.memory_space<vmem>>, vector<8x8xf32>
    tpu.vector_store %arg9[%c0_14, %c8_15], %36 {strides = array<i32>} : memref<8x32xf32, #tpu.memory_space<vmem>>, vector<8x8xf32>,
    %38 = arith.index_cast %3 : i32 to index
    %c16 = arith.constant 16 : index
    %39 = vector.load %arg8[%38, %c16] : memref<8x96xf32, #tpu.memory_space<vmem>>, vector<8x8xf32>
    %c0_16 = arith.constant 0 : index
    %c48 = arith.constant 48 : index
    %40 = vector.load %arg8[%c0_16, %c48] : memref<8x96xf32, #tpu.memory_space<vmem>>, vector<8x8xf32>
    %c0_17 = arith.constant 0 : index
    %c80 = arith.constant 80 : index
    %41 = vector.load %arg8[%c0_17, %c80] : memref<8x96xf32, #tpu.memory_space<vmem>>, vector<8x8xf32>
    %cst_18 = arith.constant dense<0.000000e+00> : vector<8x8xf32>
    %42 = tpu.matmul %39, %40, %cst_18 {dimension_numbers = #tpu.dot_dimension_numbers<[1], [1], [0], [0], [0, 0, 1, 0], [], []>} : vector<8x8xf32>, vector<8x8xf32>, vector<8x8xf32> -> vector<8x8xf32>
    %cst_19 = arith.constant dense<0xFF800000> : vector<8xf32>
    %43 = vector.multi_reduction <maximumf>, %42, %cst_19 [1] : vector<8x8xf32> to vector<8xf32>
    %44 = vector.shape_cast %43 : vector<8xf32> to vector<8x1xf32>
    %45 = vector.broadcast %44 : vector<8x1xf32> to vector<8x8xf32>
    %46 = arith.subf %42, %45 : vector<8x8xf32>
    %47 = math.exp %46 : vector<8x8xf32>
    %cst_20 = arith.constant dense<0.000000e+00> : vector<8xf32>
    %48 = vector.multi_reduction <add>, %47, %cst_20 [1] : vector<8x8xf32> to vector<8xf32>
    %49 = vector.shape_cast %48 : vector<8xf32> to vector<8x1xf32>
    %cst_21 = arith.constant dense<0.000000e+00> : vector<8x8xf32>
    %50 = tpu.matmul %47, %41, %cst_21 {dimension_numbers = #tpu.dot_dimension_numbers<[1], [0], [0], [1], [0, 0, 1, 1], [], []>} : vector<8x8xf32>, vector<8x8xf32>, vector<8x8xf32> -> vector<8x8xf32>
    %51 = tpu.reciprocal %49 : vector<8x1xf32> -> vector<8x1xf32>
    %52 = vector.broadcast %51 : vector<8x1xf32> to vector<8x8xf32>
    %53 = arith.mulf %50, %52 : vector<8x8xf32>
    %c0_22 = arith.constant 0 : index
    %c16_23 = arith.constant 16 : index
    %54 = vector.load %arg9[%c0_22, %c16_23] : memref<8x32xf32, #tpu.memory_space<vmem>>, vector<8x8xf32>
    tpu.vector_store %arg9[%c0_22, %c16_23], %53 {strides = array<i32>} : memref<8x32xf32, #tpu.memory_space<vmem>>, vector<8x8xf32>,
    %55 = arith.index_cast %3 : i32 to index
    %c24 = arith.constant 24 : index
    %56 = vector.load %arg8[%55, %c24] : memref<8x96xf32, #tpu.memory_space<vmem>>, vector<8x8xf32>
    %c0_24 = arith.constant 0 : index
    %c56 = arith.constant 56 : index
    %57 = vector.load %arg8[%c0_24, %c56] : memref<8x96xf32, #tpu.memory_space<vmem>>, vector<8x8xf32>
    %c0_25 = arith.constant 0 : index
    %c88 = arith.constant 88 : index
    %58 = vector.load %arg8[%c0_25, %c88] : memref<8x96xf32, #tpu.memory_space<vmem>>, vector<8x8xf32>
    %cst_26 = arith.constant dense<0.000000e+00> : vector<8x8xf32>
    %59 = tpu.matmul %56, %57, %cst_26 {dimension_numbers = #tpu.dot_dimension_numbers<[1], [1], [0], [0], [0, 0, 1, 0], [], []>} : vector<8x8xf32>, vector<8x8xf32>, vector<8x8xf32> -> vector<8x8xf32>
    %cst_27 = arith.constant dense<0xFF800000> : vector<8xf32>
    %60 = vector.multi_reduction <maximumf>, %59, %cst_27 [1] : vector<8x8xf32> to vector<8xf32>
    %61 = vector.shape_cast %60 : vector<8xf32> to vector<8x1xf32>
    %62 = vector.broadcast %61 : vector<8x1xf32> to vector<8x8xf32>
    %63 = arith.subf %59, %62 : vector<8x8xf32>
    %64 = math.exp %63 : vector<8x8xf32>
    %cst_28 = arith.constant dense<0.000000e+00> : vector<8xf32>
    %65 = vector.multi_reduction <add>, %64, %cst_28 [1] : vector<8x8xf32> to vector<8xf32>
    %66 = vector.shape_cast %65 : vector<8xf32> to vector<8x1xf32>
    %cst_29 = arith.constant dense<0.000000e+00> : vector<8x8xf32>
    %67 = tpu.matmul %64, %58, %cst_29 {dimension_numbers = #tpu.dot_dimension_numbers<[1], [0], [0], [1], [0, 0, 1, 1], [], []>} : vector<8x8xf32>, vector<8x8xf32>, vector<8x8xf32> -> vector<8x8xf32>
    %68 = tpu.reciprocal %66 : vector<8x1xf32> -> vector<8x1xf32>
    %69 = vector.broadcast %68 : vector<8x1xf32> to vector<8x8xf32>
    %70 = arith.mulf %67, %69 : vector<8x8xf32>
    %c0_30 = arith.constant 0 : index
    %c24_31 = arith.constant 24 : index
    %71 = vector.load %arg9[%c0_30, %c24_31] : memref<8x32xf32, #tpu.memory_space<vmem>>, vector<8x8xf32>
    tpu.vector_store %arg9[%c0_30, %c24_31], %70 {strides = array<i32>} : memref<8x32xf32, #tpu.memory_space<vmem>>, vector<8x8xf32>,
    %c0_32 = arith.constant 0 : index
    %c0_33 = arith.constant 0 : index
    %72 = vector.load %arg9[%c0_32, %c0_33] : memref<8x32xf32, #tpu.memory_space<vmem>>, vector<8x32xf32>
    %c0_34 = arith.constant 0 : index
    %c0_35 = arith.constant 0 : index
    %73 = vector.load %arg5[%c0_34, %c0_35] : memref<32x32xf32, #tpu.memory_space<vmem>>, vector<32x32xf32>
    %cst_36 = arith.constant dense<0.000000e+00> : vector<8x32xf32>
    %74 = tpu.matmul %72, %73, %cst_36 {dimension_numbers = #tpu.dot_dimension_numbers<[1], [0], [0], [1], [0, 0, 1, 1], [], []>} : vector<8x32xf32>, vector<32x32xf32>, vector<8x32xf32> -> vector<8x32xf32>
    %c0_37 = arith.constant 0 : index
    %c0_38 = arith.constant 0 : index
    %75 = vector.load %arg6[%c0_37, %c0_38] : memref<1x32xf32, #tpu.memory_space<vmem>>, vector<1x32xf32>
    %76 = vector.broadcast %75 : vector<1x32xf32> to vector<8x32xf32>
    %77 = arith.addf %74, %76 : vector<8x32xf32>
    %c0_39 = arith.constant 0 : index
    %c0_40 = arith.constant 0 : index
    %c0_41 = arith.constant 0 : index
    %78 = vector.load %arg7[%c0_39, %c0_40, %c0_41] : memref<1x8x32xf32, #tpu.memory_space<vmem>>, vector<1x8x32xf32>
    %79 = vector.shape_cast %78 : vector<1x8x32xf32> to vector<8x32xf32>
    %80 = vector.shape_cast %77 : vector<8x32xf32> to vector<1x8x32xf32>
    tpu.vector_store %arg7[%c0_39, %c0_40, %c0_41], %80 {strides = array<i32>} : memref<1x8x32xf32, #tpu.memory_space<vmem>>, vector<1x8x32xf32>,
    return
  }
  func.func @transform_0(%arg0: i32, %arg1: i32) -> (i32, i32, i32) {
    %c0_i32 = arith.constant 0 : i32
    %c0_i32_0 = arith.constant 0 : i32
    %c0_i32_1 = arith.constant 0 : i32
    return %arg0, %c0_i32, %c0_i32_0 : i32, i32, i32
  }
  func.func @transform_1(%arg0: i32, %arg1: i32) -> (i32, i32) {
    %c0_i32 = arith.constant 0 : i32
    %c0_i32_0 = arith.constant 0 : i32
    %c0_i32_1 = arith.constant 0 : i32
    return %c0_i32, %c0_i32_0 : i32, i32
  }
  func.func @transform_2(%arg0: i32, %arg1: i32) -> (i32, i32) {
    %c0_i32 = arith.constant 0 : i32
    %c0_i32_0 = arith.constant 0 : i32
    %c0_i32_1 = arith.constant 0 : i32
    return %c0_i32, %c0_i32_0 : i32, i32
  }
  func.func @transform_3(%arg0: i32, %arg1: i32) -> (i32, i32) {
    %c0_i32 = arith.constant 0 : i32
    %c0_i32_0 = arith.constant 0 : i32
    %c0_i32_1 = arith.constant 0 : i32
    return %c0_i32, %c0_i32_0 : i32, i32
  }
  func.func @transform_4(%arg0: i32, %arg1: i32) -> (i32, i32) {
    %c0_i32 = arith.constant 0 : i32
    %c0_i32_0 = arith.constant 0 : i32
    %c0_i32_1 = arith.constant 0 : i32
    return %c0_i32, %c0_i32_0 : i32, i32
  }
  func.func @transform_5(%arg0: i32, %arg1: i32) -> (i32, i32, i32) {
    %c0_i32 = arith.constant 0 : i32
    %c0_i32_0 = arith.constant 0 : i32
    return %arg0, %arg1, %c0_i32 : i32, i32, i32
  }
}

</mosaic_0001>

<llo_original>
// kernel: tpu_custom_call.1
$region0: #{tpu_custom_call.1}
  #allocation0 [shape = 'u32[]', space=smem, size = 0x4, offset = 0x4, fixed_abs, tag = 'smem constant byte address 0x4 - core index']
  #allocation1 [shape = 'u32[72,128]{1,0:T(1,128)}', space=vmem, size = 0x9000, scoped, tag = 'internal scratch']
  #allocation2 [shape = 'f32[8,96]{1,0:T(8,128)}', space=vmem, size = 0x1000, scoped, tag = 'scratch operand']
  #allocation3 [shape = 'f32[8,32]{1,0:T(8,128)}', space=vmem, size = 0x1000, scoped, tag = 'scratch operand']
  %s0 = inlined_call_operand.hbm [shape: f32[2,8,32], index: 0, kind: input, shape index: {}]
  %s1 = inlined_call_operand.hbm [shape: f32[32,96], index: 1, kind: input, shape index: {}]
  %s2 = inlined_call_operand.vmem [shape: f32[1,96], index: 2, kind: input, shape index: {}]
  %s3 = inlined_call_operand.hbm [shape: f32[32,32], index: 3, kind: input, shape index: {}]
  %s4 = inlined_call_operand.vmem [shape: f32[1,32], index: 4, kind: input, shape index: {}]
  %s5 = inlined_call_operand.hbm [shape: f32[2,8,32], index: 5, kind: output, shape index: {}]
  %s6 = sld [smem:[#allocation0]]
  $region69: #{tpu_custom_call.1} parent=0
    _
  %s8 = ssub.s32 1, %s6
  %s9 = scalar_select 0, %s8, %s6
  $region1: #{tpu_custom_call.1} parent=0
    #allocation4 [shape = 'u8[8192]{0}', space=vmem, size = 0x2000, scoped, tag = 'input window, operand 0']
    #allocation5 [shape = 's32[2]{0}', space=sflag, size = 0x8, scoped, tag = 'scoped memory for tpu_custom_call.1']
    #allocation6 [shape = 's32[2]{0}', space=sflag, size = 0x8, scoped, tag = 'scoped memory for tpu_custom_call.1']
    #allocation7 [shape = 'u8[16384]{0}', space=vmem, size = 0x4000, scoped, tag = 'input window, operand 1, single buffered']
    #allocation8 [shape = 's32[1]{0}', space=sflag, size = 0x4, scoped, tag = 'scoped memory for tpu_custom_call.1']
    #allocation9 [shape = 'u8[16384]{0}', space=vmem, size = 0x4000, scoped, tag = 'input window, operand 3, single buffered']
    #allocation10 [shape = 'u8[8192]{0}', space=vmem, size = 0x2000, scoped, tag = 'output window, operand 0']
    %10 = vsyncpa [#allocation5], 0
    %s11 = scalar_lea.sflag [#allocation5], 1
    %12 = vsyncpa %s11, 0
    %13 = vsyncpa [#allocation8], 0
    %14 = vsyncpa [#allocation6], 0
    %s15 = scalar_lea.sflag [#allocation6], 1
    %16 = vsyncpa %s15, 0
    loop: start=0, step=1, limit=4
    $region2: #{tpu_custom_call.1} parent=1 // loop_pre_header
      _
    $region3: #{tpu_custom_call.1} parent=1 // loop_header
      %s18 = sphi 0, %s22
      %p19 = scmp.ge.s32.totalorder %s18, 4
      %s25 = sphi 0, %s37
      %s26 = sphi 0, %s33
      %s27 = sphi 0, %s25
      %s28 = sphi 0, %s26
      %s29 = sphi 0, %s27
      %s30 = sphi 0, %s28
      %s40 = sphi 0, %s42
      %s43 = sphi 0, %s40
      %s44 = sphi 0, %s43
      %s60 = sphi 0, %s44
      %s64 = sphi 0, %s64
      %s66 = sphi 0, %s64
      %s67 = sphi 0, %s66
      %s81 = sphi 0, %s67
      %s85 = sphi 0, %s85
      %s87 = sphi 0, %s85
      %s88 = sphi 0, %s87
      %s102 = sphi 0, %s88
      %s106 = sphi 0, %s106
      %s108 = sphi 0, %s106
      %s109 = sphi 0, %s108
      %s123 = sphi 0, %s109
      %s127 = sphi 0, %s127
      %s129 = sphi 0, %s127
      %s130 = sphi 0, %s129
      %s144 = sphi 0, %s130
      %s152 = sphi 0, %s154
      %s155 = sphi 0, %s152
      %s156 = sphi 0, %s155
      %s172 = sphi 0, %s156
    $region4: #{tpu_custom_call.1} parent=1 // loop_header_branch
      %21 = sbr.rel (%p19) target = $region8
    $region5: #{tpu_custom_call.1} parent=1 // loop_body
      %s23 = ssub.s32 %s18, 1
      %s24 = ssub.s32 %s18, 2
      %s31 = sadd.s32 1, %s26
      %p32 = scmp.ge.s32.totalorder %s31, 1
      %s33 = scalar_select %p32, 0, %s31
      %s34 = sadd.s32 1, %s25
      %s35 = scalar_select %p32, %s34, %s25
      %p36 = scmp.ge.s32.totalorder %s35, 2
      %s37 = scalar_select %p36, 0, %s35
      %s38 = ssub.s32 %s25, %s37
      %p39 = scmp.eq.s32.totalorder %s38, 0
      %s41 = sadd.s32 %s40, 1
      %s42 = scalar_select %p39, %s40, %s41
      %p45 = pneg %p39
      %p46 = scmp.eq.s32.totalorder %s18, 1
      %p47 = por %p45, %p46
      %p48 = scmp.ne.s32.totalorder %s40, %s43
      %p49 = scmp.eq.s32.totalorder %s18, 0
      %p50 = por %p48, %p49
      %p51 = scmp.ne.s32.totalorder %s40, %s43
      %p52 = scmp.eq.s32.totalorder %s23, 1
      %p53 = por %p51, %p52
      %p54 = scmp.ne.s32.totalorder %s43, %s44
      %p55 = scmp.eq.s32.totalorder %s23, 0
      %p56 = por %p54, %p55
      %p57 = scmp.ne.s32.totalorder %s43, %s44
      %p58 = scmp.eq.s32.totalorder %s24, 1
      %p59 = por %p57, %p58
      %p61 = scmp.ne.s32.totalorder %s44, %s60
      %p62 = scmp.eq.s32.totalorder %s24, 0
      %p63 = por %p61, %p62
      %s65 = sadd.s32 %s64, 1
      %p68 = scmp.eq.s32.totalorder %s18, 1
      %p69 = scmp.ne.s32.totalorder %s64, %s66
      %p70 = scmp.eq.s32.totalorder %s18, 0
      %p71 = por %p69, %p70
      %p72 = scmp.ne.s32.totalorder %s64, %s66
      %p73 = scmp.eq.s32.totalorder %s23, 1
      %p74 = por %p72, %p73
      %p75 = scmp.ne.s32.totalorder %s66, %s67
      %p76 = scmp.eq.s32.totalorder %s23, 0
      %p77 = por %p75, %p76
      %p78 = scmp.ne.s32.totalorder %s66, %s67
      %p79 = scmp.eq.s32.totalorder %s24, 1
      %p80 = por %p78, %p79
      %p82 = scmp.ne.s32.totalorder %s67, %s81
      %p83 = scmp.eq.s32.totalorder %s24, 0
      %p84 = por %p82, %p83
      %s86 = sadd.s32 %s85, 1
      %p89 = scmp.eq.s32.totalorder %s18, 1
      %p90 = scmp.ne.s32.totalorder %s85, %s87
      %p91 = scmp.eq.s32.totalorder %s18, 0
      %p92 = por %p90, %p91
      %p93 = scmp.ne.s32.totalorder %s85, %s87
      %p94 = scmp.eq.s32.totalorder %s23, 1
      %p95 = por %p93, %p94
      %p96 = scmp.ne.s32.totalorder %s87, %s88
      %p97 = scmp.eq.s32.totalorder %s23, 0
      %p98 = por %p96, %p97
      %p99 = scmp.ne.s32.totalorder %s87, %s88
      %p100 = scmp.eq.s32.totalorder %s24, 1
      %p101 = por %p99, %p100
      %p103 = scmp.ne.s32.totalorder %s88, %s102
      %p104 = scmp.eq.s32.totalorder %s24, 0
      %p105 = por %p103, %p104
      %s107 = sadd.s32 %s106, 1
      %p110 = scmp.eq.s32.totalorder %s18, 1
      %p111 = scmp.ne.s32.totalorder %s106, %s108
      %p112 = scmp.eq.s32.totalorder %s18, 0
      %p113 = por %p111, %p112
      %p114 = scmp.ne.s32.totalorder %s106, %s108
      %p115 = scmp.eq.s32.totalorder %s23, 1
      %p116 = por %p114, %p115
      %p117 = scmp.ne.s32.totalorder %s108, %s109
      %p118 = scmp.eq.s32.totalorder %s23, 0
      %p119 = por %p117, %p118
      %p120 = scmp.ne.s32.totalorder %s108, %s109
      %p121 = scmp.eq.s32.totalorder %s24, 1
      %p122 = por %p120, %p121
      %p124 = scmp.ne.s32.totalorder %s109, %s123
      %p125 = scmp.eq.s32.totalorder %s24, 0
      %p126 = por %p124, %p125
      %s128 = sadd.s32 %s127, 1
      %p131 = scmp.eq.s32.totalorder %s18, 1
      %p132 = scmp.ne.s32.totalorder %s127, %s129
      %p133 = scmp.eq.s32.totalorder %s18, 0
      %p134 = por %p132, %p133
      %p135 = scmp.ne.s32.totalorder %s127, %s129
      %p136 = scmp.eq.s32.totalorder %s23, 1
      %p137 = por %p135, %p136
      %p138 = scmp.ne.s32.totalorder %s129, %s130
      %p139 = scmp.eq.s32.totalorder %s23, 0
      %p140 = por %p138, %p139
      %p141 = scmp.ne.s32.totalorder %s129, %s130
      %p142 = scmp.eq.s32.totalorder %s24, 1
      %p143 = por %p141, %p142
      %p145 = scmp.ne.s32.totalorder %s130, %s144
      %p146 = scmp.eq.s32.totalorder %s24, 0
      %p147 = por %p145, %p146
      %s148 = ssub.s32 %s25, %s37
      %s149 = ssub.s32 %s26, %s33
      %s150 = sor.u32 %s148, %s149
      %p151 = scmp.eq.s32.totalorder %s150, 0
      %s153 = sadd.s32 %s152, 1
      %s154 = scalar_select %p151, %s152, %s153
      %p157 = pneg %p151
      %p158 = scmp.eq.s32.totalorder %s18, 1
      %p159 = por %p157, %p158
      %p160 = scmp.ne.s32.totalorder %s152, %s155
      %p161 = scmp.eq.s32.totalorder %s18, 0
      %p162 = por %p160, %p161
      %p163 = scmp.ne.s32.totalorder %s152, %s155
      %p164 = scmp.eq.s32.totalorder %s23, 1
      %p165 = por %p163, %p164
      %p166 = scmp.ne.s32.totalorder %s155, %s156
      %p167 = scmp.eq.s32.totalorder %s23, 0
      %p168 = por %p166, %p167
      %p169 = scmp.ne.s32.totalorder %s155, %s156
      %p170 = scmp.eq.s32.totalorder %s24, 1
      %p171 = por %p169, %p170
      %p173 = scmp.ne.s32.totalorder %s156, %s172
      %p174 = scmp.eq.s32.totalorder %s24, 0
      %p175 = por %p173, %p174
      %p176 = scmp.le.s32.totalorder 1, %s18
      %p177 = scmp.lt.s32.totalorder %s18, 3
      %p178 = pnand %p176, %p177
      %p179 = pneg %p178
      // Predicated region
      $region9: #{tpu_custom_call.1} parent=5 // pred_check
        _
      $region10: #{tpu_custom_call.1} parent=5 // pred_check_branch
        %181 = sbr.rel (%p178) target = $region12
      $region11: #{tpu_custom_call.1} parent=5 // pred_region
        %s182 = ssub.s32 %s18, 1
        // Predicated region
        $region13: #{tpu_custom_call.1} parent=11 // pred_check
          %p183 = pneg %p77
        $region14: #{tpu_custom_call.1} parent=11 // pred_check_branch
          %185 = sbr.rel (%p183) target = $region16
        $region15: #{tpu_custom_call.1} parent=11 // pred_region
          %187 = vsyncadd [#allocation8], 0
          %s188 = sshll.u32 %s1, 4
          %s189 = int_to_ptr.hbm [resolvable:$true] %s188
          %s190 = sshll.u32 [#allocation7], 4
          %s191 = int_to_ptr.vmem [resolvable:$true] %s190
          %196 = dma.hbm_to_vmem [thread:$0]  %s189, 512, %s191, [#allocation8], 128, 128, 8
        $region16: #{tpu_custom_call.1} parent=11 // pred_fallthru
          _
        // Predicated region
        $region17: #{tpu_custom_call.1} parent=11 // pred_check
          %p197 = pneg %p98
        $region18: #{tpu_custom_call.1} parent=11 // pred_check_branch
          %199 = sbr.rel (%p197) target = $region20
        $region19: #{tpu_custom_call.1} parent=11 // pred_region
          _
        $region20: #{tpu_custom_call.1} parent=11 // pred_fallthru
          _
        // Predicated region
        $region21: #{tpu_custom_call.1} parent=11 // pred_check
          %p200 = pneg %p119
        $region22: #{tpu_custom_call.1} parent=11 // pred_check_branch
          %202 = sbr.rel (%p200) target = $region24
        $region23: #{tpu_custom_call.1} parent=11 // pred_region
          %204 = vsyncadd [#allocation8], 0
          %s205 = sshll.u32 %s3, 4
          %s206 = int_to_ptr.hbm [resolvable:$true] %s205
          %s207 = sshll.u32 [#allocation9], 4
          %s208 = int_to_ptr.vmem [resolvable:$true] %s207
          %213 = dma.hbm_to_vmem [thread:$0]  %s206, 512, %s208, [#allocation8], 128, 128, 8
        $region24: #{tpu_custom_call.1} parent=11 // pred_fallthru
          _
        // Predicated region
        $region25: #{tpu_custom_call.1} parent=11 // pred_check
          %p214 = pneg %p140
        $region26: #{tpu_custom_call.1} parent=11 // pred_check_branch
          %216 = sbr.rel (%p214) target = $region28
        $region27: #{tpu_custom_call.1} parent=11 // pred_region
          _
        $region28: #{tpu_custom_call.1} parent=11 // pred_fallthru
          _
      $region12: #{tpu_custom_call.1} parent=5 // pred_fallthru
        _
      %p217 = scmp.lt.s32.totalorder %s18, 2
      // Predicated region
      $region29: #{tpu_custom_call.1} parent=5 // pred_check
        %p218 = pneg %p217
      $region30: #{tpu_custom_call.1} parent=5 // pred_check_branch
        %220 = sbr.rel (%p218) target = $region32
      $region31: #{tpu_custom_call.1} parent=5 // pred_region
        // Predicated region
        $region33: #{tpu_custom_call.1} parent=31 // pred_check
          %p221 = pneg %p50
        $region34: #{tpu_custom_call.1} parent=31 // pred_check_branch
          %223 = sbr.rel (%p221) target = $region36
        $region35: #{tpu_custom_call.1} parent=31 // pred_region
          %s224 = sand.u32 %s40, 1
          %s225 = scalar_lea.sflag [#allocation5], %s224
          %s226 = sand.u32 %s40, 1
          %s227 = smul.addr %s226, 8
          %s228 = scalar_lea.vmem [#allocation4], %s227
          %230 = vsyncadd %s225, 0
          %s231 = smul.addr %s25, 8
          %s232 = scalar_lea.hbm %s0, %s231
          %s234 = sshll.u32 %s232, 4
          %s235 = int_to_ptr.hbm [resolvable:$true] %s234
          %s236 = sshll.u32 %s228, 4
          %s237 = int_to_ptr.vmem [resolvable:$true] %s236
          %239 = dma.hbm_to_vmem [thread:$0]  %s235, 128, %s237, %s225
        $region36: #{tpu_custom_call.1} parent=31 // pred_fallthru
          _
      $region32: #{tpu_custom_call.1} parent=5 // pred_fallthru
        _
      %p240 = scmp.le.s32.totalorder 1, %s18
      %p241 = scmp.lt.s32.totalorder %s18, 3
      %p242 = pnand %p240, %p241
      %p243 = pneg %p242
      // Predicated region
      $region37: #{tpu_custom_call.1} parent=5 // pred_check
        _
      $region38: #{tpu_custom_call.1} parent=5 // pred_check_branch
        %245 = sbr.rel (%p242) target = $region40
      $region39: #{tpu_custom_call.1} parent=5 // pred_region
        %s246 = ssub.s32 %s18, 1
        %s247 = sand.u32 %s43, 1
        %s248 = scalar_lea.sflag [#allocation5], %s247
        %s249 = sand.u32 %s43, 1
        %s250 = smul.addr %s249, 8
        %s251 = scalar_lea.vmem [#allocation4], %s250
        // Predicated region
        $region41: #{tpu_custom_call.1} parent=39 // pred_check
          %p252 = pneg %p56
        $region42: #{tpu_custom_call.1} parent=39 // pred_check_branch
          %254 = sbr.rel (%p252) target = $region44
        $region43: #{tpu_custom_call.1} parent=39 // pred_region
          %256 = dma.done %s248, 128
        $region44: #{tpu_custom_call.1} parent=39 // pred_fallthru
          _
        // Predicated region
        $region45: #{tpu_custom_call.1} parent=39 // pred_check
          %p257 = pneg %p77
        $region46: #{tpu_custom_call.1} parent=39 // pred_check_branch
          %259 = sbr.rel (%p257) target = $region48
        $region47: #{tpu_custom_call.1} parent=39 // pred_region
          %261 = dma.done [#allocation8], 512
        $region48: #{tpu_custom_call.1} parent=39 // pred_fallthru
          _
        // Predicated region
        $region49: #{tpu_custom_call.1} parent=39 // pred_check
          %p262 = pneg %p119
        $region50: #{tpu_custom_call.1} parent=39 // pred_check_branch
          %264 = sbr.rel (%p262) target = $region52
        $region51: #{tpu_custom_call.1} parent=39 // pred_region
          %266 = dma.done [#allocation8], 512
        $region52: #{tpu_custom_call.1} parent=39 // pred_fallthru
          _
        %s267 = sand.u32 %s43, 1
        %s268 = scalar_lea.sflag [#allocation5], %s267
        %s269 = sand.u32 %s43, 1
        %s270 = smul.addr %s269, 8
        %s271 = scalar_lea.vmem [#allocation4], %s270
        %p272 = pneg %p56
        %p273 = pneg %p53
        %p274 = pneg %p77
        %p275 = pneg %p74
        %p276 = pneg %p98
        %p277 = pneg %p95
        %p278 = pneg %p119
        %p279 = pneg %p116
        %p280 = pneg %p140
        %p281 = pneg %p137
        %p282 = pneg %p168
        %p283 = pneg %p165
        %s284 = sand.u32 %s155, 1
        %s285 = scalar_lea.sflag [#allocation6], %s284
        %s286 = sand.u32 %s155, 1
        %s287 = smul.addr %s286, 8
        %s288 = scalar_lea.vmem [#allocation10], %s287
        %p289 = scmp.eq.s32.totalorder %s28, 0
        // Predicated region
        $region53: #{tpu_custom_call.1} parent=39 // pred_check
          %p290 = pneg %p289
        $region54: #{tpu_custom_call.1} parent=39 // pred_check_branch
          %292 = sbr.rel (%p290) target = $region56
        $region55: #{tpu_custom_call.1} parent=39 // pred_region
          %v293 = vld [vmem:[%s251] sm:$0xff]
          %v294 = vld [vmem:[#allocation7] sm:$0xff]
          %v295 = vld [vmem:[#allocation7 + $0x8] sm:$0xff]
          %v296 = vld [vmem:[#allocation7 + $0x10] sm:$0xff]
          %v297 = vld [vmem:[#allocation7 + $0x18] sm:$0xff]
          %v298 = vld [vmem:[%s2] sm:$0x1]
          %v300 = vperm.slane %v298, 0
          %vm302 = vcmask 261120
          %v304 = vsel %vm302, %v293, 0
          %306 = vmatpush.msra.mxu0 0.0
          %307 = vmatpush.msra.mxu0 0.0
          %308 = vmatpush.msra.mxu0 0.0
          %309 = vmatpush.msra.mxu0 0.0
          %310 = vmatpush.msra.mxu0 0.0
          %311 = vmatpush.msra.mxu0 0.0
          %312 = vmatpush.msra.mxu0 0.0
          %313 = vmatpush.msra.mxu0 0.0
          %314 = vmatpush.msra.mxu0 0.0
          %315 = vmatpush.msra.mxu0 0.0
          %316 = vmatpush.msra.mxu0 0.0
          %317 = vmatpush.msra.mxu0 0.0
          %318 = vmatpush.msra.mxu0 %v297
          %319 = vmatpush.msra.mxu0 %v296
          %320 = vmatpush.msra.mxu0 %v295
          %321 = vmatpush.msra.mxu0 %v294
          %322 = vmatmul.f32.gmra.mxu0 %v304
          %v323 = vpop.f32.mrf.mxu0
          %v324 = vadd.f32 %v300, %v323
          %325 = vdwg.mxu0
          %vm326 = vcmask 785408
          %327 = vst.msk [vmem:[#allocation2] sm:$0xff] %vm326, %v324
        $region56: #{tpu_custom_call.1} parent=39 // pred_fallthru
          _
        %s328 = smul.u32 %s28, 8
        %s329 = scalar_lea.vmem [#allocation2], %s328
        %v330 = vld [vmem:[%s329] sm:$0xff]
        %v331 = vld [vmem:[#allocation2] sm:$0xff]
        %333 = vrot.lane.b32.xlu0 %v331, 96
        %v334 = vpop.permute.xlu0 %333
        %vm335 = vcmask 64512
        %v337 = vsel %vm335, %v330, 0
        %v339 = vsel %vm335, %v334, 0
        %341 = vmatpush.xpose.msra.mxu0 0.0
        %342 = vmatpush.xpose.msra.mxu0 0.0
        %343 = vmatpush.xpose.msra.mxu0 0.0
        %344 = vmatpush.xpose.msra.mxu0 0.0
        %345 = vmatpush.xpose.msra.mxu0 0.0
        %346 = vmatpush.xpose.msra.mxu0 0.0
        %347 = vmatpush.xpose.msra.mxu0 0.0
        %348 = vmatpush.xpose.msra.mxu0 0.0
        %349 = vmatpush.xpose.msra.mxu0 0.0
        %350 = vmatpush.xpose.msra.mxu0 0.0
        %351 = vmatpush.xpose.msra.mxu0 0.0
        %352 = vmatpush.xpose.msra.mxu0 0.0
        %353 = vmatpush.xpose.msra.mxu0 0.0
        %354 = vmatpush.xpose.msra.mxu0 0.0
        %355 = vmatpush.xpose.msra.mxu0 0.0
        %356 = vmatpush.xpose.msra.mxu0 %v339
        %357 = vmatmul.f32.gmra.mxu0 %v337
        %v358 = vpop.f32.mrf.mxu0
        %v359 = vadd.f32 0.0, %v358
        %360 = vdwg.mxu0
        %v361 = vsel %vm335, %v359, -inf
        %362 = vmax.xlane.f32.xlu0 %v361
        %v363 = vpop.xlane.xlu0 %362
        %v364 = vsub.f32 %v359, %v363
        %v365 = vmul.f32 %v364, 1.442695
        %v366 = vpow.pop %v365
        %v367 = vsel %vm335, %v366, 0.0
        %368 = vadd.xlane.f32.xlu0 %v367
        %v369 = vpop.xlane.xlu0 %368
        %370 = vrot.lane.b32.xlu0 %v331, 64
        %v371 = vpop.permute.xlu0 %370
        %v374 = vsel %vm335, %v366, 0
        %376 = vmatpush.msra.mxu0 0.0
        %377 = vmatpush.msra.mxu0 0.0
        %378 = vmatpush.msra.mxu0 0.0
        %379 = vmatpush.msra.mxu0 0.0
        %380 = vmatpush.msra.mxu0 0.0
        %381 = vmatpush.msra.mxu0 0.0
        %382 = vmatpush.msra.mxu0 0.0
        %383 = vmatpush.msra.mxu0 0.0
        %384 = vmatpush.msra.mxu0 0.0
        %385 = vmatpush.msra.mxu0 0.0
        %386 = vmatpush.msra.mxu0 0.0
        %387 = vmatpush.msra.mxu0 0.0
        %388 = vmatpush.msra.mxu0 0.0
        %389 = vmatpush.msra.mxu0 0.0
        %390 = vmatpush.msra.mxu0 0.0
        %391 = vmatpush.msra.mxu0 %v371
        %392 = vmatmul.f32.gmra.mxu0 %v374
        %v393 = vpop.f32.mrf.mxu0
        %v394 = vadd.f32 0.0, %v393
        %395 = vdwg.mxu0
        %v396 = vrcp.pop %v369
        %v397 = vmul.f32 %v369, %v396
        %v398 = vsub.f32 1.0, %v397
        %v399 = vmul.f32 %v396, %v398
        %v400 = vadd.f32 %v396, %v399
        %vm401 = vweird.f32 %v369
        %vm402 = vweird.f32 %v396
        %vm403 = vmor %vm401, %vm402
        %v404 = vsel %vm403, %v396, %v400
        %v405 = vand.u32 2147483647, %v369
        %vm406 = vcmp.eq.f32.partialorder %v405, 8.507059e+37
        %v407 = vand.u32 %v369, 2147483648
        %v408 = vor.u32 1.1754944e-38, %v407
        %v409 = vsel %vm406, %v408, %v404
        %v410 = vmul.f32 %v394, %v409
        %411 = vst.msk [vmem:[#allocation3] sm:$0xff] %vm335, %v410
        %v412 = vld [vmem:[%s329] sm:$0xff]
        %v413 = vld [vmem:[#allocation2] sm:$0xff]
        %415 = vrot.lane.b32.xlu0 %v412, 120
        %v416 = vpop.permute.xlu0 %415
        %418 = vrot.lane.b32.xlu0 %v413, 88
        %v419 = vpop.permute.xlu0 %418
        %v420 = vsel %vm335, %v416, 0
        %v422 = vsel %vm335, %v419, 0
        %424 = vmatpush.xpose.msra.mxu0 0.0
        %425 = vmatpush.xpose.msra.mxu0 0.0
        %426 = vmatpush.xpose.msra.mxu0 0.0
        %427 = vmatpush.xpose.msra.mxu0 0.0
        %428 = vmatpush.xpose.msra.mxu0 0.0
        %429 = vmatpush.xpose.msra.mxu0 0.0
        %430 = vmatpush.xpose.msra.mxu0 0.0
        %431 = vmatpush.xpose.msra.mxu0 0.0
        %432 = vmatpush.xpose.msra.mxu0 0.0
        %433 = vmatpush.xpose.msra.mxu0 0.0
        %434 = vmatpush.xpose.msra.mxu0 0.0
        %435 = vmatpush.xpose.msra.mxu0 0.0
        %436 = vmatpush.xpose.msra.mxu0 0.0
        %437 = vmatpush.xpose.msra.mxu0 0.0
        %438 = vmatpush.xpose.msra.mxu0 0.0
        %439 = vmatpush.xpose.msra.mxu0 %v422
        %440 = vmatmul.f32.gmra.mxu0 %v420
        %v441 = vpop.f32.mrf.mxu0
        %v442 = vadd.f32 0.0, %v441
        %443 = vdwg.mxu0
        %v444 = vsel %vm335, %v442, -inf
        %445 = vmax.xlane.f32.xlu0 %v444
        %v446 = vpop.xlane.xlu0 %445
        %v447 = vsub.f32 %v442, %v446
        %v448 = vmul.f32 %v447, 1.442695
        %v449 = vpow.pop %v448
        %v450 = vsel %vm335, %v449, 0.0
        %451 = vadd.xlane.f32.xlu0 %v450
        %v452 = vpop.xlane.xlu0 %451
        %453 = vrot.lane.b32.xlu0 %v413, 56
        %v454 = vpop.permute.xlu0 %453
        %v457 = vsel %vm335, %v449, 0
        %459 = vmatpush.msra.mxu0 0.0
        %460 = vmatpush.msra.mxu0 0.0
        %461 = vmatpush.msra.mxu0 0.0
        %462 = vmatpush.msra.mxu0 0.0
        %463 = vmatpush.msra.mxu0 0.0
        %464 = vmatpush.msra.mxu0 0.0
        %465 = vmatpush.msra.mxu0 0.0
        %466 = vmatpush.msra.mxu0 0.0
        %467 = vmatpush.msra.mxu0 0.0
        %468 = vmatpush.msra.mxu0 0.0
        %469 = vmatpush.msra.mxu0 0.0
        %470 = vmatpush.msra.mxu0 0.0
        %471 = vmatpush.msra.mxu0 0.0
        %472 = vmatpush.msra.mxu0 0.0
        %473 = vmatpush.msra.mxu0 0.0
        %474 = vmatpush.msra.mxu0 %v454
        %475 = vmatmul.f32.gmra.mxu0 %v457
        %v476 = vpop.f32.mrf.mxu0
        %v477 = vadd.f32 0.0, %v476
        %478 = vdwg.mxu0
        %v479 = vrcp.pop %v452
        %v480 = vmul.f32 %v452, %v479
        %v481 = vsub.f32 1.0, %v480
        %v482 = vmul.f32 %v479, %v481
        %v483 = vadd.f32 %v479, %v482
        %vm484 = vweird.f32 %v452
        %vm485 = vweird.f32 %v479
        %vm486 = vmor %vm484, %vm485
        %v487 = vsel %vm486, %v479, %v483
        %v488 = vand.u32 2147483647, %v452
        %vm489 = vcmp.eq.f32.partialorder %v488, 8.507059e+37
        %v490 = vand.u32 %v452, 2147483648
        %v491 = vor.u32 1.1754944e-38, %v490
        %v492 = vsel %vm489, %v491, %v487
        %v493 = vmul.f32 %v477, %v492
        %495 = vrot.lane.b32.xlu0 %v493, 8
        %v496 = vpop.permute.xlu0 %495
        %vm498 = vcmask 130112
        %499 = vst.msk [vmem:[#allocation3] sm:$0xff] %vm498, %v496
        %v500 = vld [vmem:[%s329] sm:$0xff]
        %v501 = vld [vmem:[#allocation2] sm:$0xff]
        %503 = vrot.lane.b32.xlu0 %v500, 112
        %v504 = vpop.permute.xlu0 %503
        %506 = vrot.lane.b32.xlu0 %v501, 80
        %v507 = vpop.permute.xlu0 %506
        %v508 = vsel %vm335, %v504, 0
        %v510 = vsel %vm335, %v507, 0
        %512 = vmatpush.xpose.msra.mxu0 0.0
        %513 = vmatpush.xpose.msra.mxu0 0.0
        %514 = vmatpush.xpose.msra.mxu0 0.0
        %515 = vmatpush.xpose.msra.mxu0 0.0
        %516 = vmatpush.xpose.msra.mxu0 0.0
        %517 = vmatpush.xpose.msra.mxu0 0.0
        %518 = vmatpush.xpose.msra.mxu0 0.0
        %519 = vmatpush.xpose.msra.mxu0 0.0
        %520 = vmatpush.xpose.msra.mxu0 0.0
        %521 = vmatpush.xpose.msra.mxu0 0.0
        %522 = vmatpush.xpose.msra.mxu0 0.0
        %523 = vmatpush.xpose.msra.mxu0 0.0
        %524 = vmatpush.xpose.msra.mxu0 0.0
        %525 = vmatpush.xpose.msra.mxu0 0.0
        %526 = vmatpush.xpose.msra.mxu0 0.0
        %527 = vmatpush.xpose.msra.mxu0 %v510
        %528 = vmatmul.f32.gmra.mxu0 %v508
        %v529 = vpop.f32.mrf.mxu0
        %v530 = vadd.f32 0.0, %v529
        %531 = vdwg.mxu0
        %v532 = vsel %vm335, %v530, -inf
        %533 = vmax.xlane.f32.xlu0 %v532
        %v534 = vpop.xlane.xlu0 %533
        %v535 = vsub.f32 %v530, %v534
        %v536 = vmul.f32 %v535, 1.442695
        %v537 = vpow.pop %v536
        %v538 = vsel %vm335, %v537, 0.0
        %539 = vadd.xlane.f32.xlu0 %v538
        %v540 = vpop.xlane.xlu0 %539
        %541 = vrot.lane.b32.xlu0 %v501, 48
        %v542 = vpop.permute.xlu0 %541
        %v545 = vsel %vm335, %v537, 0
        %547 = vmatpush.msra.mxu0 0.0
        %548 = vmatpush.msra.mxu0 0.0
        %549 = vmatpush.msra.mxu0 0.0
        %550 = vmatpush.msra.mxu0 0.0
        %551 = vmatpush.msra.mxu0 0.0
        %552 = vmatpush.msra.mxu0 0.0
        %553 = vmatpush.msra.mxu0 0.0
        %554 = vmatpush.msra.mxu0 0.0
        %555 = vmatpush.msra.mxu0 0.0
        %556 = vmatpush.msra.mxu0 0.0
        %557 = vmatpush.msra.mxu0 0.0
        %558 = vmatpush.msra.mxu0 0.0
        %559 = vmatpush.msra.mxu0 0.0
        %560 = vmatpush.msra.mxu0 0.0
        %561 = vmatpush.msra.mxu0 0.0
        %562 = vmatpush.msra.mxu0 %v542
        %563 = vmatmul.f32.gmra.mxu0 %v545
        %v564 = vpop.f32.mrf.mxu0
        %v565 = vadd.f32 0.0, %v564
        %566 = vdwg.mxu0
        %v567 = vrcp.pop %v540
        %v568 = vmul.f32 %v540, %v567
        %v569 = vsub.f32 1.0, %v568
        %v570 = vmul.f32 %v567, %v569
        %v571 = vadd.f32 %v567, %v570
        %vm572 = vweird.f32 %v540
        %vm573 = vweird.f32 %v567
        %vm574 = vmor %vm572, %vm573
        %v575 = vsel %vm574, %v567, %v571
        %v576 = vand.u32 2147483647, %v540
        %vm577 = vcmp.eq.f32.partialorder %v576, 8.507059e+37
        %v578 = vand.u32 %v540, 2147483648
        %v579 = vor.u32 1.1754944e-38, %v578
        %v580 = vsel %vm577, %v579, %v575
        %v581 = vmul.f32 %v565, %v580
        %583 = vrot.lane.b32.xlu0 %v581, 16
        %v584 = vpop.permute.xlu0 %583
        %vm586 = vcmask 195712
        %587 = vst.msk [vmem:[#allocation3] sm:$0xff] %vm586, %v584
        %v588 = vld [vmem:[%s329] sm:$0xff]
        %v589 = vld [vmem:[#allocation2] sm:$0xff]
        %591 = vrot.lane.b32.xlu0 %v588, 104
        %v592 = vpop.permute.xlu0 %591
        %594 = vrot.lane.b32.xlu0 %v589, 72
        %v595 = vpop.permute.xlu0 %594
        %v596 = vsel %vm335, %v592, 0
        %v598 = vsel %vm335, %v595, 0
        %600 = vmatpush.xpose.msra.mxu0 0.0
        %601 = vmatpush.xpose.msra.mxu0 0.0
        %602 = vmatpush.xpose.msra.mxu0 0.0
        %603 = vmatpush.xpose.msra.mxu0 0.0
        %604 = vmatpush.xpose.msra.mxu0 0.0
        %605 = vmatpush.xpose.msra.mxu0 0.0
        %606 = vmatpush.xpose.msra.mxu0 0.0
        %607 = vmatpush.xpose.msra.mxu0 0.0
        %608 = vmatpush.xpose.msra.mxu0 0.0
        %609 = vmatpush.xpose.msra.mxu0 0.0
        %610 = vmatpush.xpose.msra.mxu0 0.0
        %611 = vmatpush.xpose.msra.mxu0 0.0
        %612 = vmatpush.xpose.msra.mxu0 0.0
        %613 = vmatpush.xpose.msra.mxu0 0.0
        %614 = vmatpush.xpose.msra.mxu0 0.0
        %615 = vmatpush.xpose.msra.mxu0 %v598
        %616 = vmatmul.f32.gmra.mxu0 %v596
        %v617 = vpop.f32.mrf.mxu0
        %v618 = vadd.f32 0.0, %v617
        %619 = vdwg.mxu0
        %v620 = vsel %vm335, %v618, -inf
        %621 = vmax.xlane.f32.xlu0 %v620
        %v622 = vpop.xlane.xlu0 %621
        %v623 = vsub.f32 %v618, %v622
        %v624 = vmul.f32 %v623, 1.442695
        %v625 = vpow.pop %v624
        %v626 = vsel %vm335, %v625, 0.0
        %627 = vadd.xlane.f32.xlu0 %v626
        %v628 = vpop.xlane.xlu0 %627
        %629 = vrot.lane.b32.xlu0 %v589, 40
        %v630 = vpop.permute.xlu0 %629
        %v633 = vsel %vm335, %v625, 0
        %635 = vmatpush.msra.mxu0 0.0
        %636 = vmatpush.msra.mxu0 0.0
        %637 = vmatpush.msra.mxu0 0.0
        %638 = vmatpush.msra.mxu0 0.0
        %639 = vmatpush.msra.mxu0 0.0
        %640 = vmatpush.msra.mxu0 0.0
        %641 = vmatpush.msra.mxu0 0.0
        %642 = vmatpush.msra.mxu0 0.0
        %643 = vmatpush.msra.mxu0 0.0
        %644 = vmatpush.msra.mxu0 0.0
        %645 = vmatpush.msra.mxu0 0.0
        %646 = vmatpush.msra.mxu0 0.0
        %647 = vmatpush.msra.mxu0 0.0
        %648 = vmatpush.msra.mxu0 0.0
        %649 = vmatpush.msra.mxu0 0.0
        %650 = vmatpush.msra.mxu0 %v630
        %651 = vmatmul.f32.gmra.mxu0 %v633
        %v652 = vpop.f32.mrf.mxu0
        %v653 = vadd.f32 0.0, %v652
        %654 = vdwg.mxu0
        %v655 = vrcp.pop %v628
        %v656 = vmul.f32 %v628, %v655
        %v657 = vsub.f32 1.0, %v656
        %v658 = vmul.f32 %v655, %v657
        %v659 = vadd.f32 %v655, %v658
        %vm660 = vweird.f32 %v628
        %vm661 = vweird.f32 %v655
        %vm662 = vmor %vm660, %vm661
        %v663 = vsel %vm662, %v655, %v659
        %v664 = vand.u32 2147483647, %v628
        %vm665 = vcmp.eq.f32.partialorder %v664, 8.507059e+37
        %v666 = vand.u32 %v628, 2147483648
        %v667 = vor.u32 1.1754944e-38, %v666
        %v668 = vsel %vm665, %v667, %v663
        %v669 = vmul.f32 %v653, %v668
        %671 = vrot.lane.b32.xlu0 %v669, 24
        %v672 = vpop.permute.xlu0 %671
        %vm674 = vcmask 261312
        %675 = vst.msk [vmem:[#allocation3] sm:$0xff] %vm674, %v672
        %v676 = vld [vmem:[#allocation3] sm:$0xff]
        %v677 = vld [vmem:[#allocation9] sm:$0xff]
        %v678 = vld [vmem:[#allocation9 + $0x8] sm:$0xff]
        %v679 = vld [vmem:[#allocation9 + $0x10] sm:$0xff]
        %v680 = vld [vmem:[#allocation9 + $0x18] sm:$0xff]
        %v681 = vld [vmem:[%s4] sm:$0x1]
        %v683 = vperm.slane %v681, 0
        %vm685 = vcmask 261120
        %v687 = vsel %vm685, %v676, 0
        %689 = vmatpush.msra.mxu0 0.0
        %690 = vmatpush.msra.mxu0 0.0
        %691 = vmatpush.msra.mxu0 0.0
        %692 = vmatpush.msra.mxu0 0.0
        %693 = vmatpush.msra.mxu0 0.0
        %694 = vmatpush.msra.mxu0 0.0
        %695 = vmatpush.msra.mxu0 0.0
        %696 = vmatpush.msra.mxu0 0.0
        %697 = vmatpush.msra.mxu0 0.0
        %698 = vmatpush.msra.mxu0 0.0
        %699 = vmatpush.msra.mxu0 0.0
        %700 = vmatpush.msra.mxu0 0.0
        %701 = vmatpush.msra.mxu0 %v680
        %702 = vmatpush.msra.mxu0 %v679
        %703 = vmatpush.msra.mxu0 %v678
        %704 = vmatpush.msra.mxu0 %v677
        %705 = vmatmul.f32.gmra.mxu0 %v687
        %v706 = vpop.f32.mrf.mxu0
        %v707 = vadd.f32 %v683, %v706
        %708 = vdwg.mxu0
        %709 = vst.msk [vmem:[%s288] sm:$0xff] %vm685, %v707
        %s710 = sand.u32 %s155, 1
        %s711 = scalar_lea.sflag [#allocation6], %s710
        %s712 = sand.u32 %s155, 1
        %s713 = smul.addr %s712, 8
        %s714 = scalar_lea.vmem [#allocation10], %s713
        // Predicated region
        $region57: #{tpu_custom_call.1} parent=39 // pred_check
          %p715 = pneg %p165
        $region58: #{tpu_custom_call.1} parent=39 // pred_check_branch
          %717 = sbr.rel (%p715) target = $region60
        $region59: #{tpu_custom_call.1} parent=39 // pred_region
          %719 = vsyncadd %s711, 0
          %s720 = sadd.s32 %s28, %s27
          %s721 = smul.addr %s720, 8
          %s722 = scalar_lea.hbm %s5, %s721
          %s724 = sshll.u32 %s714, 4
          %s725 = int_to_ptr.vmem [resolvable:$true] %s724
          %s726 = sshll.u32 %s722, 4
          %s727 = int_to_ptr.hbm [resolvable:$true] %s726
          %729 = dma.vmem_to_hbm [thread:$0]  %s725, 128, %s727, %s711
        $region60: #{tpu_custom_call.1} parent=39 // pred_fallthru
          _
      $region40: #{tpu_custom_call.1} parent=5 // pred_fallthru
        _
      %p730 = scmp.le.s32.totalorder 2, %s18
      // Predicated region
      $region61: #{tpu_custom_call.1} parent=5 // pred_check
        %p731 = pneg %p730
      $region62: #{tpu_custom_call.1} parent=5 // pred_check_branch
        %733 = sbr.rel (%p731) target = $region64
      $region63: #{tpu_custom_call.1} parent=5 // pred_region
        %s734 = ssub.s32 %s18, 2
        // Predicated region
        $region65: #{tpu_custom_call.1} parent=63 // pred_check
          %p735 = pneg %p171
        $region66: #{tpu_custom_call.1} parent=63 // pred_check_branch
          %737 = sbr.rel (%p735) target = $region68
        $region67: #{tpu_custom_call.1} parent=63 // pred_region
          %s738 = sand.u32 %s156, 1
          %s739 = scalar_lea.sflag [#allocation6], %s738
          %s740 = sand.u32 %s156, 1
          %s741 = smul.addr %s740, 8
          %s742 = scalar_lea.vmem [#allocation10], %s741
          %744 = dma.done %s739, 128
        $region68: #{tpu_custom_call.1} parent=63 // pred_fallthru
          _
      $region64: #{tpu_custom_call.1} parent=5 // pred_fallthru
        _
    $region6: #{tpu_custom_call.1} parent=1 // loop_footer
      %s22 = sadd.s32 1, %s18
    $region7: #{tpu_custom_call.1} parent=1 // loop_footer_branch
      %17 = sbr.rel target = $region3
    $region8: #{tpu_custom_call.1} parent=1 // loop_exit
      _
    %745 = vsyncpa [#allocation5], 1
    %s746 = scalar_lea.sflag [#allocation5], 1
    %747 = vsyncpa %s746, 1
    %748 = vsyncpa [#allocation8], 1
    %749 = vsyncpa [#allocation6], 1
    %s750 = scalar_lea.sflag [#allocation6], 1
    %751 = vsyncpa %s750, 1

</llo_original>
